<compile_context>
chip_gen: v5e
topology: v5e:2x2
jax: 0.10.0
libtpu: 0.0.40
codegen_flags: <defaults>
</compile_context>

<pallas_src>
import functools

import jax
import jax.numpy as jnp
from jax.experimental import pallas as pl
from jax.experimental.pallas import tpu as pltpu

_MAX_TILE_DEFAULT = 32768   # lanes per grid step (~6 MiB double-buffered footprint)
_SMALL_N_FALLBACK = 4096    # below this, a fused XLA path beats a kernel launch


def _ls_kernel(pred_ref, tgt_ref, out_ref, *, smoothing: float, num_classes: int):
    # pred_ref: (C, TN), tgt_ref: (1, TN) int32, out_ref: (1, TN) f32
    pred = pred_ref[...].astype(jnp.float32)             # (C, TN)
    tgt = tgt_ref[...]                                     # (1, TN)
    c, tn = pred.shape

    # log_softmax over the class axis (axis 0 -> short sublane reduces).
    m = jnp.max(pred, axis=0, keepdims=True)               # (1, TN)
    z = pred - m
    lse = jnp.log(jnp.sum(jnp.exp(z), axis=0, keepdims=True))
    logp = z - lse                                          # (C, TN)

    # Gather logp at the target class via a masked sublane reduce.
    cls_ids = jax.lax.broadcasted_iota(jnp.int32, (c, tn), 0)
    at_tgt = jnp.sum(jnp.where(cls_ids == tgt, logp, 0.0), axis=0, keepdims=True)
    total = jnp.sum(logp, axis=0, keepdims=True)            # (1, TN)

    confidence = 1.0 - smoothing
    smooth_val = smoothing / (num_classes - 1)
    # loss_i = -sum_c true_dist[c,i] * logp[c,i]
    #        = -(smooth_val * total_i + (confidence - smooth_val) * logp[tgt_i, i])
    out_ref[...] = -(smooth_val * total + (confidence - smooth_val) * at_tgt)


def _ls_kernel_weighted(pred_ref, tgt_ref, w_ref, out_ref, *,
                        smoothing: float, num_classes: int):
    # pred_ref: (C, TN), tgt_ref: (1, TN) int32, w_ref: (C, 1) f32, out_ref: (1, TN)
    pred = pred_ref[...].astype(jnp.float32)
    tgt = tgt_ref[...]
    w = w_ref[...].astype(jnp.float32)                      # (C, 1)
    c, tn = pred.shape

    m = jnp.max(pred, axis=0, keepdims=True)
    z = pred - m
    lse = jnp.log(jnp.sum(jnp.exp(z), axis=0, keepdims=True))
    logp_w = (z - lse) * w                                   # lane-broadcast of w

    cls_ids = jax.lax.broadcasted_iota(jnp.int32, (c, tn), 0)
    at_tgt = jnp.sum(jnp.where(cls_ids == tgt, logp_w, 0.0), axis=0, keepdims=True)
    total = jnp.sum(logp_w, axis=0, keepdims=True)

    confidence = 1.0 - smoothing
    smooth_val = smoothing / (num_classes - 1)
    out_ref[...] = -(smooth_val * total + (confidence - smooth_val) * at_tgt)


def _jax_path(pred, target, weight, classes, smoothing):
    """Pure-JAX fast path for small batches (same math, no true_dist)."""
    logp = jax.nn.log_softmax(pred.astype(jnp.float32), axis=-1)
    if weight is not None:
        logp = logp * weight.astype(jnp.float32)[None, :]
    confidence = 1.0 - smoothing
    smooth_val = smoothing / (classes - 1)
    total = jnp.sum(logp, axis=-1)
    at_tgt = jnp.take_along_axis(logp, target.astype(jnp.int32)[:, None], axis=1)[:, 0]
    return jnp.mean(-(smooth_val * total + (confidence - smooth_val) * at_tgt))


def label_smoothing_loss(pred, target, weight=None, *, classes=7, smoothing=0.1,
                         use_pallas=None, max_tile=_MAX_TILE_DEFAULT,
                         pred_class_major=False):
    """pred: (N, C) float (or (C, N) if pred_class_major), target: (N,) int,
    weight: optional (C,) float.  Matches LabelSmoothingLoss.forward (mean over
    batch is unweighted even when `weight` is given, as in the module)."""
    if pred_class_major:
        c, n = pred.shape
    else:
        n, c = pred.shape
    assert c == classes, "class dim of pred must equal `classes`"
    assert classes > 1, "smoothing/(classes-1) is undefined for classes==1"

    if use_pallas is None:
        use_pallas = n >= _SMALL_N_FALLBACK
    if not use_pallas:
        p = pred.T if pred_class_major else pred
        return _jax_path(p, target, weight, classes, smoothing)

    # Lane-dense layout inside the kernel: classes on sublanes, batch on lanes.
    # TODO(synk): if the producing layer can emit (C, N) logits directly (fusing the
    # transpose into its matmul), call with pred_class_major=True and this extra
    # HBM pass disappears entirely.
    pred_t = pred if pred_class_major else pred.T            # (C, N), native dtype
    tgt_row = target.astype(jnp.int32).reshape(1, n)         # (1, N), lane-dense

    # Tile the batch (lane) axis.  No padding:
    #   * n <= tile  -> block == full array extent (always legal), grid = 1, no OOB.
    #   * n  > tile  -> tile is a multiple of 128 lanes; the ragged last block uses
    #                   Pallas partial-block handling (OOB lanes are per-lane garbage
    #                   that is never stored, since OOB stores are masked).
    LANE = 128
    if n <= max_tile:
        tile_n = n
    else:
        tile_n = max(LANE, (max_tile // LANE) * LANE)
    grid = (pl.cdiv(n, tile_n),)

    in_specs = [
        pl.BlockSpec((c, tile_n), lambda i: (0, i)),          # pred tile
        pl.BlockSpec((1, tile_n), lambda i: (0, i)),          # target tile (lane-dense)
    ]
    args = [pred_t, tgt_row]

    if weight is None:
        kernel = functools.partial(
            _ls_kernel, smoothing=float(smoothing), num_classes=int(classes))
    else:
        kernel = functools.partial(
            _ls_kernel_weighted, smoothing=float(smoothing), num_classes=int(classes))
        in_specs.append(pl.BlockSpec((c, 1), lambda i: (0, 0)))
        args.append(weight.astype(jnp.float32).reshape(c, 1))

    per_sample = pl.pallas_call(
        kernel,
        out_shape=jax.ShapeDtypeStruct((1, n), jnp.float32),
        grid=grid,
        in_specs=in_specs,
        out_specs=pl.BlockSpec((1, tile_n), lambda i: (0, i)),
        compiler_params=pltpu.CompilerParams(
            dimension_semantics=("parallel",),
            vmem_limit_bytes=32 * 1024 * 1024,
        ),
    )(*args)

    # Tiny final reduce in JAX (all n outputs are valid; OOB lanes were never stored).
    return jnp.mean(per_sample[0])


def _reference(pred, target, weight=None, *, classes=7, smoothing=0.1):
    logp = jax.nn.log_softmax(pred.astype(jnp.float32), axis=-1)
    if weight is not None:
        logp = logp * weight[None, :]
    confidence = 1.0 - smoothing
    true_dist = jnp.full_like(logp, smoothing / (classes - 1))
    true_dist = true_dist.at[jnp.arange(pred.shape[0]), target].set(confidence)
    return jnp.mean(jnp.sum(-true_dist * logp, axis=-1))


if __name__ == "__main__":
    key = jax.random.PRNGKey(0)
    k1, k2, k3, k4, k5 = jax.random.split(key, 5)

    classes = 7

    # Small case (the module's typical use), forced through the kernel path.
    batch = 8
    pred = jax.random.normal(k1, (batch, classes), dtype=jnp.float32)
    target = jax.random.randint(k2, (batch,), 0, classes, dtype=jnp.int32)

    loss = label_smoothing_loss(pred, target, classes=classes, smoothing=0.1,
                                use_pallas=True)
    loss = jax.block_until_ready(loss)
    ref = _reference(pred, target, classes=classes, smoothing=0.1)
    assert jnp.allclose(loss, ref, atol=1e-5, rtol=1e-5), (loss, ref)

    # Auto path (small n -> pure-JAX fallback) must agree as well.
    loss_fb = jax.block_until_ready(
        label_smoothing_loss(pred, target, classes=classes, smoothing=0.1))
    assert jnp.allclose(loss_fb, ref, atol=1e-5, rtol=1e-5), (loss_fb, ref)

    # Weighted case through the kernel.
    weight = jax.random.uniform(k3, (classes,), dtype=jnp.float32) + 0.5
    loss_w = label_smoothing_loss(pred, target, weight, classes=classes, smoothing=0.1,
                                  use_pallas=True)
    loss_w = jax.block_until_ready(loss_w)
    ref_w = _reference(pred, target, weight, classes=classes, smoothing=0.1)
    assert jnp.allclose(loss_w, ref_w, atol=1e-5, rtol=1e-5), (loss_w, ref_w)

    # Multi-step grid with a ragged last tile (exercises partial blocks and the
    # "parallel" axis); max_tile shrunk so this small test still spans 5 steps.
    batch2 = 2500
    pred2 = jax.random.normal(k4, (batch2, classes), dtype=jnp.float32)
    target2 = jax.random.randint(k5, (batch2,), 0, classes, dtype=jnp.int32)
    loss2 = label_smoothing_loss(pred2, target2, classes=classes, smoothing=0.1,
                                 use_pallas=True, max_tile=512)
    loss2 = jax.block_until_ready(loss2)
    ref2 = _reference(pred2, target2, classes=classes, smoothing=0.1)
    assert jnp.allclose(loss2, ref2, atol=1e-5, rtol=1e-5), (loss2, ref2)

    # Single full-extent tile where n is not a multiple of 128 (no padding needed).
    loss3 = label_smoothing_loss(pred2, target2, classes=classes, smoothing=0.1,
                                 use_pallas=True)
    loss3 = jax.block_until_ready(loss3)
    assert jnp.allclose(loss3, ref2, atol=1e-5, rtol=1e-5), (loss3, ref2)

    # Producer-side class-major layout (skips the wrapper transpose HLO).
    loss4 = label_smoothing_loss(pred2.T, target2, classes=classes, smoothing=0.1,
                                 use_pallas=True, pred_class_major=True)
    loss4 = jax.block_until_ready(loss4)
    assert jnp.allclose(loss4, ref2, atol=1e-5, rtol=1e-5), (loss4, ref2)

    print("KERNEL_OK")
</pallas_src>

<mosaic_0001>
module attributes {stable_mosaic.version = 11 : i64} {
  func.func @_ls_kernel(%arg0: i32, %arg1: memref<7x8xf32, #tpu.memory_space<vmem>>, %arg2: memref<1x8xi32, #tpu.memory_space<vmem>>, %arg3: memref<1x8xf32, #tpu.memory_space<vmem>>) attributes {dimension_semantics = [#tpu.dimension_semantics<parallel>], iteration_bounds = array<i64: 1>, scalar_prefetch = 0 : i64, scratch_operands = 0 : i64, tpu.core_type = #tpu.core_type<tc>, window_params = [{transform_indices = @transform_0, window_bounds = array<i64: 7, 8>}, {transform_indices = @transform_1, window_bounds = array<i64: 1, 8>}, {transform_indices = @transform_2, window_bounds = array<i64: 1, 8>}]} {
    %c0 = arith.constant 0 : index
    %c0_0 = arith.constant 0 : index
    %0 = vector.load %arg1[%c0, %c0_0] : memref<7x8xf32, #tpu.memory_space<vmem>>, vector<7x8xf32>
    %c0_1 = arith.constant 0 : index
    %c0_2 = arith.constant 0 : index
    %1 = vector.load %arg2[%c0_1, %c0_2] : memref<1x8xi32, #tpu.memory_space<vmem>>, vector<1x8xi32>
    %cst = arith.constant dense<0xFF800000> : vector<8xf32>
    %2 = vector.multi_reduction <maximumf>, %0, %cst [0] : vector<7x8xf32> to vector<8xf32>
    %3 = vector.shape_cast %2 : vector<8xf32> to vector<1x8xf32>
    %4 = vector.broadcast %3 : vector<1x8xf32> to vector<7x8xf32>
    %5 = arith.subf %0, %4 : vector<7x8xf32>
    %6 = math.exp %5 : vector<7x8xf32>
    %cst_3 = arith.constant dense<0.000000e+00> : vector<8xf32>
    %7 = vector.multi_reduction <add>, %6, %cst_3 [0] : vector<7x8xf32> to vector<8xf32>
    %8 = vector.shape_cast %7 : vector<8xf32> to vector<1x8xf32>
    %9 = math.log %8 : vector<1x8xf32>
    %10 = vector.broadcast %9 : vector<1x8xf32> to vector<7x8xf32>
    %11 = arith.subf %5, %10 : vector<7x8xf32>
    %12 = tpu.iota {dimensions = array<i32: 0>} : vector<7x8xi32>
    %13 = vector.broadcast %1 : vector<1x8xi32> to vector<7x8xi32>
    %14 = arith.cmpi eq, %12, %13 : vector<7x8xi32>
    %cst_4 = arith.constant 0.000000e+00 : f32
    %15 = vector.broadcast %cst_4 : f32 to vector<7x8xf32>
    %16 = arith.select %14, %11, %15 : vector<7x8xi1>, vector<7x8xf32>
    %cst_5 = arith.constant dense<0.000000e+00> : vector<8xf32>
    %17 = vector.multi_reduction <add>, %16, %cst_5 [0] : vector<7x8xf32> to vector<8xf32>
    %18 = vector.shape_cast %17 : vector<8xf32> to vector<1x8xf32>
    %cst_6 = arith.constant dense<0.000000e+00> : vector<8xf32>
    %19 = vector.multi_reduction <add>, %11, %cst_6 [0] : vector<7x8xf32> to vector<8xf32>
    %20 = vector.shape_cast %19 : vector<8xf32> to vector<1x8xf32>
    %cst_7 = arith.constant 0.0166666675 : f32
    %21 = vector.broadcast %cst_7 : f32 to vector<1x8xf32>
    %22 = arith.mulf %21, %20 : vector<1x8xf32>
    %cst_8 = arith.constant 0.883333325 : f32
    %23 = vector.broadcast %cst_8 : f32 to vector<1x8xf32>
    %24 = arith.mulf %23, %18 : vector<1x8xf32>
    %25 = arith.addf %22, %24 : vector<1x8xf32>
    %cst_9 = arith.constant 0.000000e+00 : f32
    %26 = vector.broadcast %cst_9 : f32 to vector<1x8xf32>
    %27 = arith.subf %26, %25 : vector<1x8xf32>
    %c0_10 = arith.constant 0 : index
    %c0_11 = arith.constant 0 : index
    %28 = vector.load %arg3[%c0_10, %c0_11] : memref<1x8xf32, #tpu.memory_space<vmem>>, vector<1x8xf32>
    tpu.vector_store %arg3[%c0_10, %c0_11], %27 {strides = array<i32>} : memref<1x8xf32, #tpu.memory_space<vmem>>, vector<1x8xf32>,
    return
  }
  func.func @transform_0(%arg0: i32) -> (i32, i32) {
    %c0_i32 = arith.constant 0 : i32
    %c0_i32_0 = arith.constant 0 : i32
    return %c0_i32, %arg0 : i32, i32
  }
  func.func @transform_1(%arg0: i32) -> (i32, i32) {
    %c0_i32 = arith.constant 0 : i32
    %c0_i32_0 = arith.constant 0 : i32
    return %c0_i32, %arg0 : i32, i32
  }
  func.func @transform_2(%arg0: i32) -> (i32, i32) {
    %c0_i32 = arith.constant 0 : i32
    %c0_i32_0 = arith.constant 0 : i32
    return %c0_i32, %arg0 : i32, i32
  }
}

</mosaic_0001>

<llo_original>
// kernel: tpu_custom_call.1
$region0: #{tpu_custom_call.1}
  #allocation0 [shape = 'u32[]', space=smem, size = 0x4, offset = 0x4, fixed_abs, tag = 'smem constant byte address 0x4 - core index']
  #allocation1 [shape = 'u32[72,128]{1,0:T(1,128)}', space=vmem, size = 0x9000, scoped, tag = 'internal scratch']
  %s0 = inlined_call_operand.hbm [shape: f32[7,8], index: 0, kind: input, shape index: {}]
  %s1 = inlined_call_operand.hbm [shape: s32[1,8], index: 1, kind: input, shape index: {}]
  %s2 = inlined_call_operand.hbm [shape: f32[1,8], index: 2, kind: output, shape index: {}]
  %s3 = sld [smem:[#allocation0]]
  $region26: #{tpu_custom_call.1} parent=0
    _
  %s5 = ssub.s32 1, %s3
  %s6 = scalar_select 0, %s5, %s3
  $region1: #{tpu_custom_call.1} parent=0
    #allocation2 [shape = 'u8[4096]{0}', space=vmem, size = 0x1000, scoped, tag = 'input window, operand 0, single buffered']
    #allocation3 [shape = 's32[1]{0}', space=sflag, size = 0x4, scoped, tag = 'scoped memory for tpu_custom_call.1']
    #allocation4 [shape = 's32[1]{0}', space=sflag, size = 0x4, scoped, tag = 'scoped memory for tpu_custom_call.1']
    #allocation5 [shape = 'u8[512]{0}', space=vmem, size = 0x400, scoped, tag = 'input window, operand 1, single buffered']
    #allocation6 [shape = 's32[1]{0}', space=sflag, size = 0x4, scoped, tag = 'scoped memory for tpu_custom_call.1']
    #allocation7 [shape = 'u8[512]{0}', space=vmem, size = 0x400, scoped, tag = 'output window, operand 0, single buffered']
    %7 = vsyncpa [#allocation3], 0
    %8 = vsyncpa [#allocation6], 0
    %9 = vsyncpa [#allocation4], 0
    // Predicated region
    $region2: #{tpu_custom_call.1} parent=1 // pred_check
      _
    $region3: #{tpu_custom_call.1} parent=1 // pred_check_branch
      %11 = sbr.rel (0) target = $region5
    $region4: #{tpu_custom_call.1} parent=1 // pred_region
      %13 = vsyncadd [#allocation3], 0
      %s15 = sshll.u32 %s0, 4
      %s16 = int_to_ptr.hbm [resolvable:$true] %s15
      %s17 = sshll.u32 [#allocation2], 4
      %s18 = int_to_ptr.vmem [resolvable:$true] %s17
      %20 = dma.hbm_to_vmem [thread:$0]  %s16, 128, %s18, [#allocation3]
    $region5: #{tpu_custom_call.1} parent=1 // pred_fallthru
      _
    // Predicated region
    $region6: #{tpu_custom_call.1} parent=1 // pred_check
      _
    $region7: #{tpu_custom_call.1} parent=1 // pred_check_branch
      %22 = sbr.rel (0) target = $region9
    $region8: #{tpu_custom_call.1} parent=1 // pred_region
      %24 = vsyncadd [#allocation6], 0
      %s26 = sshll.u32 %s1, 4
      %s27 = int_to_ptr.hbm [resolvable:$true] %s26
      %s28 = sshll.u32 [#allocation5], 4
      %s29 = int_to_ptr.vmem [resolvable:$true] %s28
      %31 = dma.hbm_to_vmem [thread:$0]  %s27, 16, %s29, [#allocation6]
    $region9: #{tpu_custom_call.1} parent=1 // pred_fallthru
      _
    // Predicated region
    $region10: #{tpu_custom_call.1} parent=1 // pred_check
      _
    $region11: #{tpu_custom_call.1} parent=1 // pred_check_branch
      %33 = sbr.rel (0) target = $region13
    $region12: #{tpu_custom_call.1} parent=1 // pred_region
      %35 = dma.done [#allocation3], 128
    $region13: #{tpu_custom_call.1} parent=1 // pred_fallthru
      _
    // Predicated region
    $region14: #{tpu_custom_call.1} parent=1 // pred_check
      _
    $region15: #{tpu_custom_call.1} parent=1 // pred_check_branch
      %37 = sbr.rel (0) target = $region17
    $region16: #{tpu_custom_call.1} parent=1 // pred_region
      %39 = dma.done [#allocation6], 16
    $region17: #{tpu_custom_call.1} parent=1 // pred_fallthru
      _
    %v40 = vld [vmem:[#allocation2] sm:$0x7f]
    %v41 = vld [vmem:[#allocation5] sm:$0x1]
    %vm42 = vcmask 63488
    %v43 = vsel %vm42, %v40, -inf
    %v44 = vrot.slane %v43, 4
    %v45 = vmax.f32 %v43, %v44
    %v46 = vrot.slane %v45, 2
    %v47 = vmax.f32 %v45, %v46
    %v48 = vrot.slane %v47, 1
    %v49 = vmax.f32 %v47, %v48
    %v50 = vsub.f32 %v40, %v49
    %v51 = vmul.f32 %v50, 1.442695
    %v52 = vpow.pop %v51
    %v53 = vsel %vm42, %v52, 0.0
    %v54 = vrot.slane %v53, 4
    %v55 = vadd.f32 %v53, %v54
    %v56 = vrot.slane %v55, 2
    %v57 = vadd.f32 %v55, %v56
    %v58 = vrot.slane %v57, 1
    %v59 = vadd.f32 %v57, %v58
    %v60 = vlog2.pop %v59
    %v61 = vmul.f32 %v60, 0.6931472
    %v62 = vsub.f32 %v50, %v61
    %v63 = vlaneseq
    %v64 = vshrl.u32 %v63, 7
    %v65 = vperm.slane %v41, 0
    %vm66 = vcmp.eq.s32.totalorder %v64, %v65
    %v67 = vsel %vm66, %v62, 0.0
    %v68 = vsel %vm42, %v67, 0.0
    %v69 = vrot.slane %v68, 4
    %v70 = vadd.f32 %v68, %v69
    %v71 = vrot.slane %v70, 2
    %v72 = vadd.f32 %v70, %v71
    %v73 = vrot.slane %v72, 1
    %v74 = vadd.f32 %v72, %v73
    %v75 = vsel %vm42, %v62, 0.0
    %v76 = vrot.slane %v75, 4
    %v77 = vadd.f32 %v75, %v76
    %v78 = vrot.slane %v77, 2
    %v79 = vadd.f32 %v77, %v78
    %v80 = vrot.slane %v79, 1
    %v81 = vadd.f32 %v79, %v80
    %v82 = vmul.f32 %v81, 0.016666668
    %v83 = vmul.f32 %v74, 0.8833333
    %v84 = vadd.f32 %v82, %v83
    %v85 = vsub.f32 0.0, %v84
    %vm86 = vcmask 57344
    %87 = vst.msk [vmem:[#allocation7] sm:$0x1] %vm86, %v85
    // Predicated region
    $region18: #{tpu_custom_call.1} parent=1 // pred_check
      _
    $region19: #{tpu_custom_call.1} parent=1 // pred_check_branch
      %89 = sbr.rel (0) target = $region21
    $region20: #{tpu_custom_call.1} parent=1 // pred_region
      %91 = vsyncadd [#allocation4], 0
      %s93 = sshll.u32 [#allocation7], 4
      %s94 = int_to_ptr.vmem [resolvable:$true] %s93
      %s95 = sshll.u32 %s2, 4
      %s96 = int_to_ptr.hbm [resolvable:$true] %s95
      %98 = dma.vmem_to_hbm [thread:$0]  %s94, 16, %s96, [#allocation4]
    $region21: #{tpu_custom_call.1} parent=1 // pred_fallthru
      _
    // Predicated region
    $region22: #{tpu_custom_call.1} parent=1 // pred_check
      _
    $region23: #{tpu_custom_call.1} parent=1 // pred_check_branch
      %100 = sbr.rel (0) target = $region25
    $region24: #{tpu_custom_call.1} parent=1 // pred_region
      %102 = dma.done [#allocation4], 16
    $region25: #{tpu_custom_call.1} parent=1 // pred_fallthru
      _
    %103 = vsyncpa [#allocation3], 1
    %104 = vsyncpa [#allocation6], 1
    %105 = vsyncpa [#allocation4], 1

</llo_original>
